<compile_context>
chip_gen: v5e
topology: v5e:2x2
jax: 0.10.0
libtpu: 0.0.40
codegen_flags: <defaults>
</compile_context>

<pallas_src>
import functools
import math

import jax
import jax.numpy as jnp
from jax.experimental import pallas as pl
from jax.experimental.pallas import tpu as pltpu


def _arcface_kernel(labels_ref, logits_ref, out_ref, *, s, cos_m, sin_m, tile_c):
    """One grid step handles a (tile_b, tile_c) slab of the [B, C] logits."""
    j = pl.program_id(1)

    x = logits_ref[...].astype(jnp.float32)          # (tb, tc)
    lab = labels_ref[...]                             # (tb, 1) int32

    # Shift the scalar label into this tile's local column space instead of
    # materializing global column indices (saves a full-width VPU add).
    local_lab = lab - j * tile_c                       # (tb, 1)
    col = jax.lax.broadcasted_iota(jnp.int32, x.shape, 1)
    is_target = jnp.logical_and(col == local_lab, lab != -1)

    # cos(arccos(x) + m2) = x*cos(m2) - sin(m2)*sqrt(1 - x^2); clamp the sqrt
    # argument so |x| marginally above 1 (fp error upstream) cannot NaN.
    sin_theta = jnp.sqrt(jnp.maximum(jnp.float32(1.0) - x * x, jnp.float32(0.0)))
    t = x * jnp.float32(cos_m) - jnp.float32(sin_m) * sin_theta

    out_ref[...] = (jnp.float32(s) * jnp.where(is_target, t, x)).astype(out_ref.dtype)


def combined_margin_loss(logits, labels, *, s=64.0, m1=1.0, m2=0.5, m3=0.0,
                         interclass_filtering_threshold=0.0,
                         tile_b=256, tile_c=2048):
    """Pallas implementation of CombinedMarginLoss.forward (ArcFace branch)."""
    assert m1 == 1.0 and m3 == 0.0, "only the ArcFace (m1==1, m3==0) branch is implemented"
    # TODO(synk): interclass_filtering_threshold > 0 branch (scatter-based dirty-logit
    #             masking) not implemented; default threshold is 0 so it is skipped.
    # TODO(synk): m3 > 0 (CosFace) branch not implemented.
    assert interclass_filtering_threshold == 0.0

    B, C = logits.shape
    # Block dims must be a multiple of (8, 128) or equal the full array dim.
    tb = B if B <= tile_b else tile_b
    tc = C if C <= tile_c else tile_c

    labels2d = labels.reshape(B, 1).astype(jnp.int32)

    kernel = functools.partial(
        _arcface_kernel,
        s=float(s), cos_m=math.cos(m2), sin_m=math.sin(m2), tile_c=tc)

    return pl.pallas_call(
        kernel,
        out_shape=jax.ShapeDtypeStruct((B, C), logits.dtype),
        grid=(pl.cdiv(B, tb), pl.cdiv(C, tc)),
        in_specs=[
            pl.BlockSpec((tb, 1), lambda i, j: (i, 0)),     # labels (per row-tile)
            pl.BlockSpec((tb, tc), lambda i, j: (i, j)),    # logits tile
        ],
        out_specs=pl.BlockSpec((tb, tc), lambda i, j: (i, j)),
        compiler_params=pltpu.CompilerParams(
            dimension_semantics=("parallel", "parallel")),
    )(labels2d, logits)


def _reference(logits, labels, *, s=64.0, m2=0.5):
    """Pure-JAX reference mirroring the PyTorch forward (ArcFace branch)."""
    B, C = logits.shape
    col = jnp.arange(C)[None, :]
    is_target = (col == labels[:, None]) & (labels[:, None] != -1)
    ang = jnp.arccos(logits)
    ang = jnp.where(is_target, ang + m2, ang)
    return jnp.cos(ang) * s


if __name__ == "__main__":
    key = jax.random.PRNGKey(0)
    B, C = 8, 256
    s, m1, m2, m3 = 64.0, 1.0, 0.5, 0.0   # standard ArcFace hyperparameters

    k1, k2 = jax.random.split(key)
    # Cosine-similarity logits live in (-1, 1); keep away from the endpoints
    # so the arccos-based reference is well conditioned.
    logits = jax.random.uniform(k1, (B, C), dtype=jnp.float32, minval=-0.99, maxval=0.99)
    labels = jnp.array([3, -1, 100, 7, 255, -1, 0, 42], dtype=jnp.int32)

    out = combined_margin_loss(logits, labels, s=s, m1=m1, m2=m2, m3=m3)
    out = jax.block_until_ready(out)

    ref = _reference(logits, labels, s=s, m2=m2)
    assert out.shape == (B, C) and out.dtype == jnp.float32
    assert jnp.allclose(out, ref, atol=1e-3, rtol=1e-3), float(jnp.max(jnp.abs(out - ref)))

    print("KERNEL_OK")
</pallas_src>

<mosaic_0001>
module attributes {stable_mosaic.version = 11 : i64} {
  func.func @_arcface_kernel(%arg0: i32, %arg1: i32, %arg2: memref<8x1xi32, #tpu.memory_space<vmem>>, %arg3: memref<8x256xf32, #tpu.memory_space<vmem>>, %arg4: memref<8x256xf32, #tpu.memory_space<vmem>>) attributes {dimension_semantics = [#tpu.dimension_semantics<parallel>, #tpu.dimension_semantics<parallel>], iteration_bounds = array<i64: 1, 1>, scalar_prefetch = 0 : i64, scratch_operands = 0 : i64, tpu.core_type = #tpu.core_type<tc>, window_params = [{transform_indices = @transform_0, window_bounds = array<i64: 8, 1>}, {transform_indices = @transform_1, window_bounds = array<i64: 8, 256>}, {transform_indices = @transform_2, window_bounds = array<i64: 8, 256>}]} {
    %c0 = arith.constant 0 : index
    %c0_0 = arith.constant 0 : index
    %0 = vector.load %arg3[%c0, %c0_0] : memref<8x256xf32, #tpu.memory_space<vmem>>, vector<8x256xf32>
    %c0_1 = arith.constant 0 : index
    %c0_2 = arith.constant 0 : index
    %1 = vector.load %arg2[%c0_1, %c0_2] : memref<8x1xi32, #tpu.memory_space<vmem>>, vector<8x1xi32>
    %c256_i32 = arith.constant 256 : i32
    %2 = arith.muli %arg1, %c256_i32 : i32
    %3 = vector.broadcast %2 : i32 to vector<8x1xi32>
    %4 = arith.subi %1, %3 : vector<8x1xi32>
    %5 = tpu.iota {dimensions = array<i32: 1>} : vector<8x256xi32>
    %6 = vector.broadcast %4 : vector<8x1xi32> to vector<8x256xi32>
    %7 = arith.cmpi eq, %5, %6 : vector<8x256xi32>
    %c-1_i32 = arith.constant -1 : i32
    %8 = vector.broadcast %c-1_i32 : i32 to vector<8x1xi32>
    %9 = arith.cmpi ne, %1, %8 : vector<8x1xi32>
    %10 = vector.broadcast %9 : vector<8x1xi1> to vector<8x256xi1>
    %11 = arith.andi %7, %10 : vector<8x256xi1>
    %12 = arith.mulf %0, %0 : vector<8x256xf32>
    %cst = arith.constant 1.000000e+00 : f32
    %13 = vector.broadcast %cst : f32 to vector<8x256xf32>
    %14 = arith.subf %13, %12 : vector<8x256xf32>
    %cst_3 = arith.constant 0.000000e+00 : f32
    %15 = vector.broadcast %cst_3 : f32 to vector<8x256xf32>
    %16 = arith.maximumf %14, %15 : vector<8x256xf32>
    %17 = math.sqrt %16 : vector<8x256xf32>
    %cst_4 = arith.constant 0.87758255 : f32
    %18 = vector.broadcast %cst_4 : f32 to vector<8x256xf32>
    %19 = arith.mulf %0, %18 : vector<8x256xf32>
    %cst_5 = arith.constant 0.47942555 : f32
    %20 = vector.broadcast %cst_5 : f32 to vector<8x256xf32>
    %21 = arith.mulf %20, %17 : vector<8x256xf32>
    %22 = arith.subf %19, %21 : vector<8x256xf32>
    %23 = arith.select %11, %22, %0 : vector<8x256xi1>, vector<8x256xf32>
    %cst_6 = arith.constant 6.400000e+01 : f32
    %24 = vector.broadcast %cst_6 : f32 to vector<8x256xf32>
    %25 = arith.mulf %24, %23 : vector<8x256xf32>
    %c0_7 = arith.constant 0 : index
    %c0_8 = arith.constant 0 : index
    %26 = vector.load %arg4[%c0_7, %c0_8] : memref<8x256xf32, #tpu.memory_space<vmem>>, vector<8x256xf32>
    tpu.vector_store %arg4[%c0_7, %c0_8], %25 {strides = array<i32>} : memref<8x256xf32, #tpu.memory_space<vmem>>, vector<8x256xf32>,
    return
  }
  func.func @transform_0(%arg0: i32, %arg1: i32) -> (i32, i32) {
    %c0_i32 = arith.constant 0 : i32
    %c0_i32_0 = arith.constant 0 : i32
    return %arg0, %c0_i32 : i32, i32
  }
  func.func @transform_1(%arg0: i32, %arg1: i32) -> (i32, i32) {
    %c0_i32 = arith.constant 0 : i32
    return %arg0, %arg1 : i32, i32
  }
  func.func @transform_2(%arg0: i32, %arg1: i32) -> (i32, i32) {
    %c0_i32 = arith.constant 0 : i32
    return %arg0, %arg1 : i32, i32
  }
}

</mosaic_0001>

<llo_original>
// kernel: tpu_custom_call.1
$region0: #{tpu_custom_call.1}
  #allocation0 [shape = 'u32[]', space=smem, size = 0x4, offset = 0x4, fixed_abs, tag = 'smem constant byte address 0x4 - core index']
  #allocation1 [shape = 'u32[72,128]{1,0:T(1,128)}', space=vmem, size = 0x9000, scoped, tag = 'internal scratch']
  %s0 = inlined_call_operand.vmem [shape: s32[8,1], index: 0, kind: input, shape index: {}]
  %s1 = inlined_call_operand.hbm [shape: f32[8,256], index: 1, kind: input, shape index: {}]
  %s2 = inlined_call_operand.hbm [shape: f32[8,256], index: 2, kind: output, shape index: {}]
  %s3 = sld [smem:[#allocation0]]
  $region22: #{tpu_custom_call.1} parent=0
    _
  %s5 = ssub.s32 1, %s3
  %s6 = scalar_select 0, %s5, %s3
  $region1: #{tpu_custom_call.1} parent=0
    #allocation2 [shape = 'u8[8192]{0}', space=vmem, size = 0x2000, scoped, tag = 'input window, operand 1, single buffered']
    #allocation3 [shape = 's32[1]{0}', space=sflag, size = 0x4, scoped, tag = 'scoped memory for tpu_custom_call.1']
    #allocation4 [shape = 's32[1]{0}', space=sflag, size = 0x4, scoped, tag = 'scoped memory for tpu_custom_call.1']
    #allocation5 [shape = 'u8[8192]{0}', space=vmem, size = 0x2000, scoped, tag = 'output window, operand 0, single buffered']
    %7 = vsyncpa [#allocation3], 0
    %8 = vsyncpa [#allocation4], 0
    // Predicated region
    $region2: #{tpu_custom_call.1} parent=1 // pred_check
      _
    $region3: #{tpu_custom_call.1} parent=1 // pred_check_branch
      %10 = sbr.rel (0) target = $region5
    $region4: #{tpu_custom_call.1} parent=1 // pred_region
      _
    $region5: #{tpu_custom_call.1} parent=1 // pred_fallthru
      _
    // Predicated region
    $region6: #{tpu_custom_call.1} parent=1 // pred_check
      _
    $region7: #{tpu_custom_call.1} parent=1 // pred_check_branch
      %12 = sbr.rel (0) target = $region9
    $region8: #{tpu_custom_call.1} parent=1 // pred_region
      %14 = vsyncadd [#allocation3], 0
      %s16 = sshll.u32 %s1, 4
      %s17 = int_to_ptr.hbm [resolvable:$true] %s16
      %s18 = sshll.u32 [#allocation2], 4
      %s19 = int_to_ptr.vmem [resolvable:$true] %s18
      %21 = dma.hbm_to_vmem [thread:$0]  %s17, 256, %s19, [#allocation3]
    $region9: #{tpu_custom_call.1} parent=1 // pred_fallthru
      _
    // Predicated region
    $region10: #{tpu_custom_call.1} parent=1 // pred_check
      _
    $region11: #{tpu_custom_call.1} parent=1 // pred_check_branch
      %23 = sbr.rel (0) target = $region13
    $region12: #{tpu_custom_call.1} parent=1 // pred_region
      %25 = dma.done [#allocation3], 256
    $region13: #{tpu_custom_call.1} parent=1 // pred_fallthru
      _
    %v26 = vld [vmem:[#allocation2] sm:$0xff]
    %v27 = vld [vmem:[#allocation2 + $0x8] sm:$0xff]
    %v28 = vld [vmem:[%s0] sm:$0xff]
    %s29 = smul.u32 0, 256
    %v30 = vstv %s29
    %v31 = vsub.s32 %v28, %v30
    %v32 = vlaneseq
    %v33 = vand.u32 %v32, 127
    %v34 = vadd.s32 %v33, 128
    %35 = vset.pattern.permute.xlu0 0
    %36 = vperm.xlu0 %35, %v31
    %v37 = vpop.permute.xlu0 %36
    %vm38 = vcmp.eq.s32.totalorder %v33, %v37
    %vm39 = vcmp.eq.s32.totalorder %v34, %v37
    %vm40 = vcmp.ne.s32.totalorder %v28, 4294967295
    %v41 = vsel %vm40, 1, 0
    %42 = vset.pattern.permute.xlu0 0
    %43 = vperm.xlu0 %42, %v41
    %v44 = vpop.permute.xlu0 %43
    %vm45 = vcmp.eq.s32.totalorder %v44, 1
    %vm46 = vmand %vm38, %vm45
    %vm47 = vmand %vm39, %vm45
    %v48 = vmul.f32 %v26, %v26
    %v49 = vmul.f32 %v27, %v27
    %v50 = vsub.f32 1.0, %v48
    %v51 = vsub.f32 1.0, %v49
    %v52 = vmax.f32 %v50, 0.0
    %v53 = vmax.f32 %v51, 0.0
    %v54 = vrsqrt.pop %v52
    %v55 = vmul.f32 %v54, %v52
    %v56 = vmul.f32 %v55, %v54
    %v57 = vmul.f32 0.5, %v56
    %v58 = vsub.f32 1.5, %v57
    %v59 = vmul.f32 %v54, %v58
    %v60 = vmul.f32 %v52, %v59
    %vm61 = vcmp.eq.f32.partialorder %v52, inf
    %v62 = vsel %vm61, %v52, %v60
    %vm63 = vcmp.eq.f32.partialorder %v52, 0.0
    %v64 = vand.u32 %v52, 2147483648
    %v65 = vsel %vm63, %v64, %v62
    %v66 = vrsqrt.pop %v53
    %v67 = vmul.f32 %v66, %v53
    %v68 = vmul.f32 %v67, %v66
    %v69 = vmul.f32 0.5, %v68
    %v70 = vsub.f32 1.5, %v69
    %v71 = vmul.f32 %v66, %v70
    %v72 = vmul.f32 %v53, %v71
    %vm73 = vcmp.eq.f32.partialorder %v53, inf
    %v74 = vsel %vm73, %v53, %v72
    %vm75 = vcmp.eq.f32.partialorder %v53, 0.0
    %v76 = vand.u32 %v53, 2147483648
    %v77 = vsel %vm75, %v76, %v74
    %v78 = vmul.f32 %v26, 0.87758255
    %v79 = vmul.f32 %v27, 0.87758255
    %v80 = vmul.f32 %v65, 0.47942555
    %v81 = vmul.f32 %v77, 0.47942555
    %v82 = vsub.f32 %v78, %v80
    %v83 = vsub.f32 %v79, %v81
    %v84 = vsel %vm46, %v82, %v26
    %v85 = vsel %vm47, %v83, %v27
    %v86 = vmul.f32 %v84, 64.0
    %v87 = vmul.f32 %v85, 64.0
    %88 = vst [vmem:[#allocation5] sm:$0xff] %v86
    %89 = vst [vmem:[#allocation5 + $0x8] sm:$0xff] %v87
    // Predicated region
    $region14: #{tpu_custom_call.1} parent=1 // pred_check
      _
    $region15: #{tpu_custom_call.1} parent=1 // pred_check_branch
      %91 = sbr.rel (0) target = $region17
    $region16: #{tpu_custom_call.1} parent=1 // pred_region
      %93 = vsyncadd [#allocation4], 0
      %s95 = sshll.u32 [#allocation5], 4
      %s96 = int_to_ptr.vmem [resolvable:$true] %s95
      %s97 = sshll.u32 %s2, 4
      %s98 = int_to_ptr.hbm [resolvable:$true] %s97
      %100 = dma.vmem_to_hbm [thread:$0]  %s96, 256, %s98, [#allocation4]
    $region17: #{tpu_custom_call.1} parent=1 // pred_fallthru
      _
    // Predicated region
    $region18: #{tpu_custom_call.1} parent=1 // pred_check
      _
    $region19: #{tpu_custom_call.1} parent=1 // pred_check_branch
      %102 = sbr.rel (0) target = $region21
    $region20: #{tpu_custom_call.1} parent=1 // pred_region
      %104 = dma.done [#allocation4], 256
    $region21: #{tpu_custom_call.1} parent=1 // pred_fallthru
      _
    %105 = vsyncpa [#allocation3], 1
    %106 = vsyncpa [#allocation4], 1

</llo_original>
